<compile_context>
chip_gen: v6e
topology: v6e:2x2x1
jax: 0.10.0
libtpu: 0.0.40
codegen_flags: <defaults>
</compile_context>

<pallas_src>
import jax
import jax.numpy as jnp
from jax import lax
from jax.experimental import pallas as pl
from jax.experimental.pallas import tpu as pltpu

_MIB = 1024 * 1024


def _round_up(x, m):
    return ((x + m - 1) // m) * m


def _vmem_capacity_bytes():
    # Per-core VMEM capacity; conservative fallback (v7x = 64 MiB per core)
    # is safe on every generation.
    try:
        return int(pltpu.get_tpu_info().vmem_capacity_bytes)
    except Exception:
        return 64 * _MIB


def _resident_spec(block_shape):
    # Constant index_map -> the block never changes across grid steps; a single
    # buffer is enough.  Fall back gracefully if pipeline_mode is unavailable.
    try:
        return pl.BlockSpec(block_shape, lambda i: (0, 0), pipeline_mode=pl.Buffered(1))
    except TypeError:
        return pl.BlockSpec(block_shape, lambda i: (0, 0))


def _slot_classifier_kernel(x_ref, w_ref, b_ref, o_ref):
    # x_ref: (TILE_M, D)  w_ref: (L_pad, D)  b_ref: (1, L_pad)  o_ref: (TILE_M, L_pad)
    # Contract D of both operands (x @ W.T) on the MXU, accumulate in f32.
    acc = lax.dot_general(
        x_ref[...],
        w_ref[...],
        dimension_numbers=(((1,), (1,)), ((), ())),
        preferred_element_type=jnp.float32,
    )
    o_ref[...] = (acc + b_ref[...]).astype(o_ref.dtype)


def _choose_tile_m(m, d, l_pad, x_itemsize, out_itemsize, w_bytes, vmem_cap):
    # Target ~65% of the per-generation VMEM (capped), minus the resident
    # single-buffered weight and some headroom for compiler internals.
    target = min((vmem_cap * 65) // 100, 96 * _MIB)
    headroom = 2 * _MIB
    budget = target - w_bytes - headroom
    bytes_per_row = 2 * (d * x_itemsize + l_pad * out_itemsize)  # 2x: double-buffered
    if budget < 8 * bytes_per_row:
        # TODO(synk): add a K-tiling fallback (extra "arbitrary" grid axis +
        # f32 accumulator scratch) for heads so large that a single-buffered W
        # leaves less than one row-tile of VMEM.
        budget = 8 * bytes_per_row
    tile = budget // bytes_per_row
    tile = max(8, min(1024, tile))
    tile = (tile // 8) * 8
    # Guarantee >= 2 grid steps so v7x's two TensorCores both get row tiles.
    tile = min(tile, _round_up(pl.cdiv(m, 2), 8))
    return max(tile, 8)


@jax.jit
def slot_classifier(x, weight, bias):
    """x: (..., input_dim); weight: (num_labels, input_dim); bias: (num_labels,).

    Returns x's leading dims with last dim = num_labels (matches F.linear;
    dropout p=0 is the identity).
    """
    orig_shape = x.shape
    input_dim = orig_shape[-1]
    num_labels = weight.shape[0]

    x2d = x.reshape(-1, input_dim)
    m = x2d.shape[0]

    # Lane-dense output columns: 128 minimum; once labels exceed one MXU column
    # block, round to 256 to fill the 2x256^2 MXUs on v6e/v7x (harmless zero
    # columns when mem-bound on v5e).
    l_gran = 256 if num_labels > 128 else 128
    l_pad = _round_up(num_labels, l_gran)

    # Keep the PyTorch (L, D) weight layout (no per-call transpose); pad only
    # the label (sublane) dim; match activation dtype for DMA / MXU path.
    w_in = weight.astype(x.dtype)
    if l_pad != num_labels:
        w_in = jnp.pad(w_in, ((0, l_pad - num_labels), (0, 0)))
        b_pad = jnp.pad(bias.astype(jnp.float32), (0, l_pad - num_labels))
    else:
        b_pad = bias.astype(jnp.float32)
    b2d = b_pad.reshape(1, l_pad)

    x_item = jnp.dtype(x.dtype).itemsize
    w_item = jnp.dtype(w_in.dtype).itemsize
    out_item = x_item

    w_bytes = l_pad * input_dim * w_item  # resident, single-buffered
    vmem_cap = _vmem_capacity_bytes()
    tile_m = _choose_tile_m(m, input_dim, l_pad, x_item, out_item, w_bytes, vmem_cap)

    grid = (pl.cdiv(m, tile_m),)

    used_vmem = (w_bytes + l_pad * 4
                 + 2 * tile_m * (input_dim * x_item + l_pad * out_item))
    vmem_limit = int(min(vmem_cap, max(used_vmem + 4 * _MIB, 32 * _MIB)))

    cost = pl.CostEstimate(
        flops=2 * m * input_dim * l_pad,
        transcendentals=0,
        bytes_accessed=(m * input_dim * x_item
                        + l_pad * input_dim * w_item
                        + m * l_pad * out_item),
    )

    out2d = pl.pallas_call(
        _slot_classifier_kernel,
        out_shape=jax.ShapeDtypeStruct((m, l_pad), x.dtype),
        grid=grid,
        in_specs=[
            pl.BlockSpec((tile_m, input_dim), lambda i: (i, 0)),  # x tile, streamed
            _resident_spec((l_pad, input_dim)),                    # W resident (1 buf)
            _resident_spec((1, l_pad)),                            # bias resident (1 buf)
        ],
        out_specs=pl.BlockSpec((tile_m, l_pad), lambda i: (i, 0)),
        compiler_params=pltpu.CompilerParams(
            dimension_semantics=("parallel",),
            vmem_limit_bytes=vmem_limit,
        ),
        cost_estimate=cost,
    )(x2d, w_in, b2d)

    out2d = out2d[:, :num_labels]
    return out2d.reshape(*orig_shape[:-1], num_labels)


if __name__ == "__main__":
    # Small shapes consistent with slot classification: (batch, seq, hidden).
    batch, seq, input_dim, num_slot_labels = 2, 8, 32, 16

    key = jax.random.PRNGKey(0)
    kx, kw, kb = jax.random.split(key, 3)

    x = jax.random.normal(kx, (batch, seq, input_dim), dtype=jnp.float32)
    # nn.Linear(input_dim, num_slot_labels) parameter shapes.
    weight = jax.random.normal(kw, (num_slot_labels, input_dim), dtype=jnp.float32) * 0.05
    bias = jax.random.normal(kb, (num_slot_labels,), dtype=jnp.float32) * 0.01

    out = slot_classifier(x, weight, bias)
    out = jax.block_until_ready(out)

    # Reference in plain JAX (same math as torch F.linear; dropout p=0 is identity).
    ref = jnp.einsum("bsd,ld->bsl", x, weight) + bias
    assert out.shape == (batch, seq, num_slot_labels)
    assert jnp.allclose(out, ref, atol=1e-5, rtol=1e-5)

    print("KERNEL_OK")
</pallas_src>

<mosaic_0001>
module attributes {stable_mosaic.version = 11 : i64} {
  func.func @_slot_classifier_kernel(%arg0: i32, %arg1: memref<8x32xf32, #tpu.memory_space<vmem>>, %arg2: memref<128x32xf32, #tpu.memory_space<vmem>>, %arg3: memref<1x128xf32, #tpu.memory_space<vmem>>, %arg4: memref<8x128xf32, #tpu.memory_space<vmem>>) attributes {dimension_semantics = [#tpu.dimension_semantics<parallel>], iteration_bounds = array<i64: 2>, scalar_prefetch = 0 : i64, scratch_operands = 0 : i64, tpu.core_type = #tpu.core_type<tc>, window_params = [{transform_indices = @transform_0, window_bounds = array<i64: 8, 32>}, {pipeline_mode = #tpu.pipeline_mode<synchronous>, transform_indices = @transform_1, window_bounds = array<i64: 128, 32>}, {pipeline_mode = #tpu.pipeline_mode<synchronous>, transform_indices = @transform_2, window_bounds = array<i64: 1, 128>}, {transform_indices = @transform_3, window_bounds = array<i64: 8, 128>}]} {
    %c0 = arith.constant 0 : index
    %c0_0 = arith.constant 0 : index
    %0 = vector.load %arg1[%c0, %c0_0] : memref<8x32xf32, #tpu.memory_space<vmem>>, vector<8x32xf32>
    %c0_1 = arith.constant 0 : index
    %c0_2 = arith.constant 0 : index
    %1 = vector.load %arg2[%c0_1, %c0_2] : memref<128x32xf32, #tpu.memory_space<vmem>>, vector<128x32xf32>
    %cst = arith.constant dense<0.000000e+00> : vector<8x128xf32>
    %2 = tpu.matmul %0, %1, %cst {dimension_numbers = #tpu.dot_dimension_numbers<[1], [1], [0], [0], [0, 0, 1, 0], [], []>} : vector<8x32xf32>, vector<128x32xf32>, vector<8x128xf32> -> vector<8x128xf32>
    %c0_3 = arith.constant 0 : index
    %c0_4 = arith.constant 0 : index
    %3 = vector.load %arg3[%c0_3, %c0_4] : memref<1x128xf32, #tpu.memory_space<vmem>>, vector<1x128xf32>
    %4 = vector.broadcast %3 : vector<1x128xf32> to vector<8x128xf32>
    %5 = arith.addf %2, %4 : vector<8x128xf32>
    %c0_5 = arith.constant 0 : index
    %c0_6 = arith.constant 0 : index
    %6 = vector.load %arg4[%c0_5, %c0_6] : memref<8x128xf32, #tpu.memory_space<vmem>>, vector<8x128xf32>
    tpu.vector_store %arg4[%c0_5, %c0_6], %5 {strides = array<i32>} : memref<8x128xf32, #tpu.memory_space<vmem>>, vector<8x128xf32>,
    return
  }
  func.func @transform_0(%arg0: i32) -> (i32, i32) {
    %c0_i32 = arith.constant 0 : i32
    %c0_i32_0 = arith.constant 0 : i32
    return %arg0, %c0_i32 : i32, i32
  }
  func.func @transform_1(%arg0: i32) -> (i32, i32) {
    %c0_i32 = arith.constant 0 : i32
    %c0_i32_0 = arith.constant 0 : i32
    %c0_i32_1 = arith.constant 0 : i32
    return %c0_i32, %c0_i32_0 : i32, i32
  }
  func.func @transform_2(%arg0: i32) -> (i32, i32) {
    %c0_i32 = arith.constant 0 : i32
    %c0_i32_0 = arith.constant 0 : i32
    %c0_i32_1 = arith.constant 0 : i32
    return %c0_i32, %c0_i32_0 : i32, i32
  }
  func.func @transform_3(%arg0: i32) -> (i32, i32) {
    %c0_i32 = arith.constant 0 : i32
    %c0_i32_0 = arith.constant 0 : i32
    return %arg0, %c0_i32 : i32, i32
  }
}

</mosaic_0001>

<llo_original>
// kernel: slot_classifier.1
$region0: #{slot_classifier.1}
  #allocation0 [shape = 'u32[]', space=smem, size = 0x4, offset = 0x4, fixed_abs, tag = 'smem constant byte address 0x4 - core index']
  #allocation1 [shape = 'u32[144,128]{1,0:T(1,128)}', space=vmem, size = 0x12000, scoped, tag = 'internal scratch']
  %s0 = inlined_call_operand.vmem [shape: f32[16,32], index: 0, kind: input, shape index: {}]
  %s1 = inlined_call_operand.vmem [shape: f32[128,32], index: 1, kind: input, shape index: {}]
  %s2 = inlined_call_operand.vmem [shape: f32[1,128], index: 2, kind: input, shape index: {}]
  %s3 = inlined_call_operand.vmem [shape: f32[16,128], index: 3, kind: output, shape index: {}]
  %s4 = sld [smem:[#allocation0]]
  $region45: #{slot_classifier.1} parent=0
    _
  %s6 = ssub.s32 1, %s4
  %s7 = scalar_select 0, %s6, %s4
  loop: start=0, step=1, limit=4
  $region2: #{slot_classifier.1} parent=0 // loop_pre_header
    _
  $region3: #{slot_classifier.1} parent=0 // loop_header
    %s9 = sphi 0, %s13
    %p10 = scmp.ge.s32.totalorder %s9, 4
    %s19 = sphi 0, %s21
    %s22 = sphi 0, %s19
    %s23 = sphi 0, %s22
    %s39 = sphi 0, %s23
    %s43 = sphi 0, %s43
    %s45 = sphi 0, %s43
    %s46 = sphi 0, %s45
    %s60 = sphi 0, %s46
    %s64 = sphi 0, %s64
    %s66 = sphi 0, %s64
    %s67 = sphi 0, %s66
    %s81 = sphi 0, %s67
    %s87 = sphi 0, %s89
    %s90 = sphi 0, %s87
    %s91 = sphi 0, %s90
    %s107 = sphi 0, %s91
  $region4: #{slot_classifier.1} parent=0 // loop_header_branch
    %12 = sbr.rel (%p10) target = $region8
  $region5: #{slot_classifier.1} parent=0 // loop_body
    %s14 = ssub.s32 %s9, 1
    %s15 = ssub.s32 %s9, 2
    %s16 = sadd.s32 %s9, 1
    %s17 = ssub.s32 %s9, %s16
    %p18 = scmp.eq.s32.totalorder %s17, 0
    %s20 = sadd.s32 %s19, 1
    %s21 = scalar_select %p18, %s19, %s20
    %p24 = pneg %p18
    %p25 = scmp.eq.s32.totalorder %s9, 1
    %p26 = por %p24, %p25
    %p27 = scmp.ne.s32.totalorder %s19, %s22
    %p28 = scmp.eq.s32.totalorder %s9, 0
    %p29 = por %p27, %p28
    %p30 = scmp.ne.s32.totalorder %s19, %s22
    %p31 = scmp.eq.s32.totalorder %s14, 1
    %p32 = por %p30, %p31
    %p33 = scmp.ne.s32.totalorder %s22, %s23
    %p34 = scmp.eq.s32.totalorder %s14, 0
    %p35 = por %p33, %p34
    %p36 = scmp.ne.s32.totalorder %s22, %s23
    %p37 = scmp.eq.s32.totalorder %s15, 1
    %p38 = por %p36, %p37
    %p40 = scmp.ne.s32.totalorder %s23, %s39
    %p41 = scmp.eq.s32.totalorder %s15, 0
    %p42 = por %p40, %p41
    %s44 = sadd.s32 %s43, 1
    %p47 = scmp.eq.s32.totalorder %s9, 1
    %p48 = scmp.ne.s32.totalorder %s43, %s45
    %p49 = scmp.eq.s32.totalorder %s9, 0
    %p50 = por %p48, %p49
    %p51 = scmp.ne.s32.totalorder %s43, %s45
    %p52 = scmp.eq.s32.totalorder %s14, 1
    %p53 = por %p51, %p52
    %p54 = scmp.ne.s32.totalorder %s45, %s46
    %p55 = scmp.eq.s32.totalorder %s14, 0
    %p56 = por %p54, %p55
    %p57 = scmp.ne.s32.totalorder %s45, %s46
    %p58 = scmp.eq.s32.totalorder %s15, 1
    %p59 = por %p57, %p58
    %p61 = scmp.ne.s32.totalorder %s46, %s60
    %p62 = scmp.eq.s32.totalorder %s15, 0
    %p63 = por %p61, %p62
    %s65 = sadd.s32 %s64, 1
    %p68 = scmp.eq.s32.totalorder %s9, 1
    %p69 = scmp.ne.s32.totalorder %s64, %s66
    %p70 = scmp.eq.s32.totalorder %s9, 0
    %p71 = por %p69, %p70
    %p72 = scmp.ne.s32.totalorder %s64, %s66
    %p73 = scmp.eq.s32.totalorder %s14, 1
    %p74 = por %p72, %p73
    %p75 = scmp.ne.s32.totalorder %s66, %s67
    %p76 = scmp.eq.s32.totalorder %s14, 0
    %p77 = por %p75, %p76
    %p78 = scmp.ne.s32.totalorder %s66, %s67
    %p79 = scmp.eq.s32.totalorder %s15, 1
    %p80 = por %p78, %p79
    %p82 = scmp.ne.s32.totalorder %s67, %s81
    %p83 = scmp.eq.s32.totalorder %s15, 0
    %p84 = por %p82, %p83
    %s85 = ssub.s32 %s9, %s16
    %p86 = scmp.eq.s32.totalorder %s85, 0
    %s88 = sadd.s32 %s87, 1
    %s89 = scalar_select %p86, %s87, %s88
    %p92 = pneg %p86
    %p93 = scmp.eq.s32.totalorder %s9, 1
    %p94 = por %p92, %p93
    %p95 = scmp.ne.s32.totalorder %s87, %s90
    %p96 = scmp.eq.s32.totalorder %s9, 0
    %p97 = por %p95, %p96
    %p98 = scmp.ne.s32.totalorder %s87, %s90
    %p99 = scmp.eq.s32.totalorder %s14, 1
    %p100 = por %p98, %p99
    %p101 = scmp.ne.s32.totalorder %s90, %s91
    %p102 = scmp.eq.s32.totalorder %s14, 0
    %p103 = por %p101, %p102
    %p104 = scmp.ne.s32.totalorder %s90, %s91
    %p105 = scmp.eq.s32.totalorder %s15, 1
    %p106 = por %p104, %p105
    %p108 = scmp.ne.s32.totalorder %s91, %s107
    %p109 = scmp.eq.s32.totalorder %s15, 0
    %p110 = por %p108, %p109
    %p111 = scmp.le.s32.totalorder 1, %s9
    %p112 = scmp.lt.s32.totalorder %s9, 3
    %p113 = pnand %p111, %p112
    %p114 = pneg %p113
    // Predicated region
    $region9: #{slot_classifier.1} parent=5 // pred_check
      _
    $region10: #{slot_classifier.1} parent=5 // pred_check_branch
      %116 = sbr.rel (%p113) target = $region12
    $region11: #{slot_classifier.1} parent=5 // pred_region
      %s117 = ssub.s32 %s9, 1
      // Predicated region
      $region13: #{slot_classifier.1} parent=11 // pred_check
        %p118 = pneg %p56
      $region14: #{slot_classifier.1} parent=11 // pred_check_branch
        %120 = sbr.rel (%p118) target = $region16
      $region15: #{slot_classifier.1} parent=11 // pred_region
        _
      $region16: #{slot_classifier.1} parent=11 // pred_fallthru
        _
      // Predicated region
      $region17: #{slot_classifier.1} parent=11 // pred_check
        %p121 = pneg %p77
      $region18: #{slot_classifier.1} parent=11 // pred_check_branch
        %123 = sbr.rel (%p121) target = $region20
      $region19: #{slot_classifier.1} parent=11 // pred_region
        _
      $region20: #{slot_classifier.1} parent=11 // pred_fallthru
        _
    $region12: #{slot_classifier.1} parent=5 // pred_fallthru
      _
    %p124 = scmp.lt.s32.totalorder %s9, 2
    // Predicated region
    $region21: #{slot_classifier.1} parent=5 // pred_check
      %p125 = pneg %p124
    $region22: #{slot_classifier.1} parent=5 // pred_check_branch
      %127 = sbr.rel (%p125) target = $region24
    $region23: #{slot_classifier.1} parent=5 // pred_region
      // Predicated region
      $region25: #{slot_classifier.1} parent=23 // pred_check
        %p128 = pneg %p29
      $region26: #{slot_classifier.1} parent=23 // pred_check_branch
        %130 = sbr.rel (%p128) target = $region28
      $region27: #{slot_classifier.1} parent=23 // pred_region
        %p131 = scmp.lt.s32.totalorder %s9, 1
        %s132 = scalar_select %p131, %s9, 1
        %s133 = smul.addr %s132, 8
        %s134 = scalar_lea.vmem %s0, %s133
      $region28: #{slot_classifier.1} parent=23 // pred_fallthru
        _
    $region24: #{slot_classifier.1} parent=5 // pred_fallthru
      _
    %p135 = scmp.le.s32.totalorder 1, %s9
    %p136 = scmp.lt.s32.totalorder %s9, 3
    %p137 = pnand %p135, %p136
    %p138 = pneg %p137
    // Predicated region
    $region29: #{slot_classifier.1} parent=5 // pred_check
      _
    $region30: #{slot_classifier.1} parent=5 // pred_check_branch
      %140 = sbr.rel (%p137) target = $region32
    $region31: #{slot_classifier.1} parent=5 // pred_region
      %s141 = ssub.s32 %s9, 1
      %p142 = scmp.lt.s32.totalorder %s14, 1
      %s143 = scalar_select %p142, %s14, 1
      %s144 = smul.addr %s143, 8
      %s145 = scalar_lea.vmem %s0, %s144
      %p146 = pneg %p35
      %p147 = pneg %p32
      %p148 = pneg %p56
      %p149 = pneg %p53
      %p150 = pneg %p77
      %p151 = pneg %p74
      %p152 = pneg %p103
      %p153 = pneg %p100
      %p154 = scmp.lt.s32.totalorder %s14, 1
      %s155 = scalar_select %p154, %s14, 1
      %s156 = smul.addr %s155, 8
      %s157 = scalar_lea.vmem %s3, %s156
      %p158 = scmp.lt.s32.totalorder %s14, 1
      %s159 = scalar_select %p158, %s14, 1
      %s160 = smul.addr %s159, 8
      %s161 = scalar_lea.vmem %s0, %s160
      %p162 = scmp.lt.s32.totalorder %s14, 1
      %s163 = scalar_select %p162, %s14, 1
      %s164 = smul.addr %s163, 8
      %s165 = scalar_lea.vmem %s3, %s164
      %v166 = vld [vmem:[%s161] sm:$0xff]
      %v167 = vld [vmem:[%s1] sm:$0xff]
      %v168 = vld [vmem:[%s1 + $0x8] sm:$0xff]
      %v169 = vld [vmem:[%s1 + $0x10] sm:$0xff]
      %v170 = vld [vmem:[%s1 + $0x18] sm:$0xff]
      %v171 = vld [vmem:[%s1 + $0x20] sm:$0xff]
      %v172 = vld [vmem:[%s1 + $0x28] sm:$0xff]
      %v173 = vld [vmem:[%s1 + $0x30] sm:$0xff]
      %v174 = vld [vmem:[%s1 + $0x38] sm:$0xff]
      %v175 = vld [vmem:[%s1 + $0x40] sm:$0xff]
      %v176 = vld [vmem:[%s1 + $0x48] sm:$0xff]
      %v177 = vld [vmem:[%s1 + $0x50] sm:$0xff]
      %v178 = vld [vmem:[%s1 + $0x58] sm:$0xff]
      %v179 = vld [vmem:[%s1 + $0x60] sm:$0xff]
      %v180 = vld [vmem:[%s1 + $0x68] sm:$0xff]
      %v181 = vld [vmem:[%s1 + $0x70] sm:$0xff]
      %v182 = vld [vmem:[%s1 + $0x78] sm:$0xff]
      %v183 = vld [vmem:[%s2] sm:$0x1]
      %v185 = vlaneseq
      %v186 = vshrl.u32 %v185, 7
      %v187 = vsub.s32 0, %v186
      %v188 = vrot.slane %v183, %v187
      %vm190 = vcmask 261120
      %v192 = vsel %vm190, %v166, 0
      %v195 = vsel %vm190, %v167, 0
      %v198 = vsel %vm190, %v168, 0
      %v201 = vsel %vm190, %v169, 0
      %v204 = vsel %vm190, %v170, 0
      %v207 = vsel %vm190, %v171, 0
      %v210 = vsel %vm190, %v172, 0
      %v213 = vsel %vm190, %v173, 0
      %v216 = vsel %vm190, %v174, 0
      %v219 = vsel %vm190, %v175, 0
      %v222 = vsel %vm190, %v176, 0
      %v225 = vsel %vm190, %v177, 0
      %v228 = vsel %vm190, %v178, 0
      %v231 = vsel %vm190, %v179, 0
      %v234 = vsel %vm190, %v180, 0
      %v237 = vsel %vm190, %v181, 0
      %v240 = vsel %vm190, %v182, 0
      %242 = vmatprep.subr.mxu0 0.0
      %243 = vmatpush1.xpose.msra.mxu0 %v240
      %244 = vmatprep.subr.mxu0 0.0
      %245 = vmatpush1.xpose.msra.mxu0 %v237
      %246 = vmatprep.subr.mxu0 0.0
      %247 = vmatpush1.xpose.msra.mxu0 %v234
      %248 = vmatprep.subr.mxu0 0.0
      %249 = vmatpush1.xpose.msra.mxu0 %v231
      %250 = vmatprep.subr.mxu0 0.0
      %251 = vmatpush1.xpose.msra.mxu0 %v228
      %252 = vmatprep.subr.mxu0 0.0
      %253 = vmatpush1.xpose.msra.mxu0 %v225
      %254 = vmatprep.subr.mxu0 0.0
      %255 = vmatpush1.xpose.msra.mxu0 %v222
      %256 = vmatprep.subr.mxu0 0.0
      %257 = vmatpush1.xpose.msra.mxu0 %v219
      %258 = vmatprep.subr.mxu0 0.0
      %259 = vmatpush1.xpose.msra.mxu0 %v216
      %260 = vmatprep.subr.mxu0 0.0
      %261 = vmatpush1.xpose.msra.mxu0 %v213
      %262 = vmatprep.subr.mxu0 0.0
      %263 = vmatpush1.xpose.msra.mxu0 %v210
      %264 = vmatprep.subr.mxu0 0.0
      %265 = vmatpush1.xpose.msra.mxu0 %v207
      %266 = vmatprep.subr.mxu0 0.0
      %267 = vmatpush1.xpose.msra.mxu0 %v204
      %268 = vmatprep.subr.mxu0 0.0
      %269 = vmatpush1.xpose.msra.mxu0 %v201
      %270 = vmatprep.subr.mxu0 0.0
      %271 = vmatpush1.xpose.msra.mxu0 %v198
      %272 = vmatprep.subr.mxu0 0.0
      %273 = vmatpush1.xpose.msra.mxu0 %v195
      %274 = vmatprep.subr.mxu0 0.0
      %275 = vmatpush2.xpose.msra.mxu0 0.0
      %276 = vmatprep.subr.mxu0 0.0
      %277 = vmatpush2.xpose.msra.mxu0 0.0
      %278 = vmatprep.subr.mxu0 0.0
      %279 = vmatpush2.xpose.msra.mxu0 0.0
      %280 = vmatprep.subr.mxu0 0.0
      %281 = vmatpush2.xpose.msra.mxu0 0.0
      %282 = vmatprep.subr.mxu0 0.0
      %283 = vmatpush2.xpose.msra.mxu0 0.0
      %284 = vmatprep.subr.mxu0 0.0
      %285 = vmatpush2.xpose.msra.mxu0 0.0
      %286 = vmatprep.subr.mxu0 0.0
      %287 = vmatpush2.xpose.msra.mxu0 0.0
      %288 = vmatprep.subr.mxu0 0.0
      %289 = vmatpush2.xpose.msra.mxu0 0.0
      %290 = vmatprep.subr.mxu0 0.0
      %291 = vmatpush2.xpose.msra.mxu0 0.0
      %292 = vmatprep.subr.mxu0 0.0
      %293 = vmatpush2.xpose.msra.mxu0 0.0
      %294 = vmatprep.subr.mxu0 0.0
      %295 = vmatpush2.xpose.msra.mxu0 0.0
      %296 = vmatprep.subr.mxu0 0.0
      %297 = vmatpush2.xpose.msra.mxu0 0.0
      %298 = vmatprep.subr.mxu0 0.0
      %299 = vmatpush2.xpose.msra.mxu0 0.0
      %300 = vmatprep.subr.mxu0 0.0
      %301 = vmatpush2.xpose.msra.mxu0 0.0
      %302 = vmatprep.subr.mxu0 0.0
      %303 = vmatpush2.xpose.msra.mxu0 0.0
      %304 = vmatprep.subr.mxu0 0.0
      %305 = vmatpush2.xpose.msra.mxu0 0.0
      %306 = vmatprep.mubr.f32.mxu0 0.0
      %307 = vmatmul.mubr.f32.gmra.mxu0 %v192
      %v308 = vpop.f32.mrf.mxu0
      %v309 = vadd.f32 %v188, %v308
      %v310 = vpop.f32.mrf.mxu0
      %311 = vdwg.mxu0
      %312 = vst [vmem:[%s165] sm:$0xff] %v309
      %p313 = scmp.lt.s32.totalorder %s14, 1
      %s314 = scalar_select %p313, %s14, 1
      %s315 = smul.addr %s314, 8
      %s316 = scalar_lea.vmem %s3, %s315
      // Predicated region
      $region33: #{slot_classifier.1} parent=31 // pred_check
        %p317 = pneg %p100
      $region34: #{slot_classifier.1} parent=31 // pred_check_branch
        %319 = sbr.rel (%p317) target = $region36
      $region35: #{slot_classifier.1} parent=31 // pred_region
        _
      $region36: #{slot_classifier.1} parent=31 // pred_fallthru
        _
    $region32: #{slot_classifier.1} parent=5 // pred_fallthru
      _
    %p320 = scmp.le.s32.totalorder 2, %s9
    // Predicated region
    $region37: #{slot_classifier.1} parent=5 // pred_check
      %p321 = pneg %p320
    $region38: #{slot_classifier.1} parent=5 // pred_check_branch
      %323 = sbr.rel (%p321) target = $region40
    $region39: #{slot_classifier.1} parent=5 // pred_region
      %s324 = ssub.s32 %s9, 2
      // Predicated region
      $region41: #{slot_classifier.1} parent=39 // pred_check
        %p325 = pneg %p106
      $region42: #{slot_classifier.1} parent=39 // pred_check_branch
        %327 = sbr.rel (%p325) target = $region44
      $region43: #{slot_classifier.1} parent=39 // pred_region
        %p328 = scmp.lt.s32.totalorder %s15, 1
        %s329 = scalar_select %p328, %s15, 1
        %s330 = smul.addr %s329, 8
        %s331 = scalar_lea.vmem %s3, %s330
      $region44: #{slot_classifier.1} parent=39 // pred_fallthru
        _
    $region40: #{slot_classifier.1} parent=5 // pred_fallthru
      _
  $region6: #{slot_classifier.1} parent=0 // loop_footer
    %s13 = sadd.s32 1, %s9
  $region7: #{slot_classifier.1} parent=0 // loop_footer_branch
    %8 = sbr.rel target = $region3
  $region8: #{slot_classifier.1} parent=0 // loop_exit
    _

</llo_original>
